<compile_context>
chip_gen: v5e
topology: v5e:2x2
jax: 0.10.0
libtpu: 0.0.40
codegen_flags: <defaults>
</compile_context>

<pallas_src>
import math

import jax
import jax.numpy as jnp
from jax.experimental import pallas as pl
from jax.experimental.pallas import tpu as pltpu


def _round_up(x: int, m: int) -> int:
    return (x + m - 1) // m * m


def _vmem_capacity_bytes() -> int:
    """Per-core VMEM capacity (128 MiB on v5e/v6e, 64 MiB per TC on v7x)."""
    try:
        cap = int(getattr(pltpu.get_tpu_info(), "vmem_capacity_bytes", 0))
        if cap > 0:
            return cap
    except Exception:
        pass
    return 64 << 20  # conservative default (v7x per-TensorCore VMEM)


def _pick_row_tile(rows: int, row_tile: int):
    """Sublane-aligned row tile; prefer one that divides `rows` exactly so no
    padded activation copy is needed.  Returns (tm, rows_padded)."""
    rows8 = _round_up(rows, 8)
    cap = max(8, min(_round_up(row_tile, 8), rows8))
    floor = min(cap, 256)          # never shrink below 256 just to divide rows
    t = cap
    while t >= floor:
        if rows % t == 0:
            return t, rows
        t -= 8
    return cap, _round_up(rows, cap)   # pad rows up to a multiple of the tile


def _pick_ff_tile(d_ff: int, ff_tile: int) -> int:
    """Largest lane-aligned (multiple-of-128) divisor of d_ff that is <= ff_tile."""
    if d_ff % 128 != 0:
        return d_ff                    # small / odd d_ff: keep whole
    t = max(128, min(_round_up(ff_tile, 128), d_ff))
    t = (t // 128) * 128
    while t >= 128:
        if d_ff % t == 0:
            return t
        t -= 128
    return d_ff


# ----------------------------------------------------------------------------
# Kernels
# ----------------------------------------------------------------------------
def _ffn_kernel_resident(x_ref, w1_ref, b1_ref, w2_ref, b2_ref, o_ref):
    """Grid = (row_tiles,).  Both weight matrices are resident in VMEM (their
    block index is constant, so they are DMA'd once); no accumulator scratch
    and no f32 read-modify-write."""
    x = x_ref[...]                                           # (TM, d_model)
    h = jnp.dot(x, w1_ref[...], preferred_element_type=jnp.float32)
    h = jnp.maximum(h + b1_ref[...].astype(jnp.float32), 0.0)   # ReLU, f32
    # TODO(synk): training-mode dropout (stateful PRNG mask) not implemented;
    # eval-mode dropout is the identity, matching module.eval() semantics.
    out = jnp.dot(h.astype(x.dtype), w2_ref[...],
                  preferred_element_type=jnp.float32)
    o_ref[...] = (out + b2_ref[...].astype(jnp.float32)).astype(o_ref.dtype)


def _ffn_kernel_streamed(x_ref, w1_ref, b1_ref, w2_ref, b2_ref, o_ref, acc_ref):
    """Grid = (row_tiles, d_ff_tiles) with the d_ff reduction axis innermost.
    W1/b1/W2 are streamed one slab at a time; partial products accumulate in a
    f32 VMEM scratch (zeroed at f == 0, flushed at the last step)."""
    f = pl.program_id(1)

    @pl.when(f == 0)
    def _():
        acc_ref[...] = jnp.zeros_like(acc_ref)

    x = x_ref[...]                                           # (TM, d_model)
    h = jnp.dot(x, w1_ref[...], preferred_element_type=jnp.float32)
    h = jnp.maximum(h + b1_ref[...].astype(jnp.float32), 0.0)   # ReLU, f32
    acc_ref[...] += jnp.dot(h.astype(x.dtype), w2_ref[...],
                            preferred_element_type=jnp.float32)

    @pl.when(f == pl.num_programs(1) - 1)
    def _():
        o_ref[...] = (acc_ref[...]
                      + b2_ref[...].astype(jnp.float32)).astype(o_ref.dtype)


# ----------------------------------------------------------------------------
# Wrapper
# ----------------------------------------------------------------------------
def feed_forward(x, w1, b1, w2, b2, *, row_tile=512, ff_tile=512,
                 compute_dtype=None, weights_resident=None):
    """x: (batch, seq, d_model); w1: (d_model, d_ff); b1: (d_ff,);
    w2: (d_ff, d_model); b2: (d_model,).  Returns (batch, seq, d_model).

    compute_dtype: optionally cast all operands (e.g. jnp.bfloat16) before the
      kernel for ~3-4x MXU throughput on v6e/v7x.  PRECISION-AFFECTING.
    weights_resident: None = auto (weights-in-VMEM single-pass path whenever
      both weight matrices fit the VMEM budget); True/False forces the choice
      (False -> stream d_ff slabs)."""
    orig_dtype = x.dtype
    if compute_dtype is not None:
        x, w1, b1, w2, b2 = (a.astype(compute_dtype) for a in (x, w1, b1, w2, b2))

    batch, seq, d_model = x.shape
    d_ff = w1.shape[1]
    rows = batch * seq
    itemsize = jnp.dtype(x.dtype).itemsize

    vmem_cap = _vmem_capacity_bytes()
    usable = max(vmem_cap - (16 << 20), vmem_cap // 2)   # headroom for compiler

    # ---- tile selection ----------------------------------------------------
    tm, rows_p = _pick_row_tile(rows, row_tile)
    w_bytes = (2 * d_model * d_ff + d_ff + d_model) * itemsize

    def _io_tiles_bytes(tm_):
        return 2 * (2 * tm_ * d_model) * itemsize        # dbl-buffered x + out

    resident_fits = (2 * w_bytes + _io_tiles_bytes(tm)) <= usable
    resident = resident_fits if weights_resident is None \
        else bool(weights_resident) and resident_fits

    if resident:
        tf = d_ff
        vmem_need = 2 * w_bytes + _io_tiles_bytes(tm)
    else:
        tf = _pick_ff_tile(d_ff, ff_tile)

        def _streamed_bytes(tm_, tf_):
            return (2 * (tm_ * d_model + d_model * tf_ + tf_ + tf_ * d_model
                         + d_model + tm_ * d_model) * itemsize
                    + tm_ * d_model * 4)                  # f32 accumulator

        vmem_need = _streamed_bytes(tm, tf)
        if vmem_need > usable and tf > 256:
            tf = _pick_ff_tile(d_ff, 256)
            vmem_need = _streamed_bytes(tm, tf)
        if vmem_need > usable and tm > 256:
            tm, rows_p = _pick_row_tile(rows, 256)
            vmem_need = _streamed_bytes(tm, tf)
        # TODO(synk): for very large d_model (>= 8192 f32) add a d_model output
        # tile axis rather than shrinking tm further.

    vmem_limit = int(min(max(vmem_need + (8 << 20), 32 << 20),
                         vmem_cap - (2 << 20)))

    # ---- operands ------------------------------------------------------------
    x2d = x.reshape(rows, d_model)
    if rows_p != rows:                      # only for awkward row counts
        x2d = jnp.pad(x2d, ((0, rows_p - rows), (0, 0)))
    b1_2d = b1.reshape(1, d_ff)
    b2_2d = b2.reshape(1, d_model)
    n_row_tiles = rows_p // tm              # keep even where possible for v7x

    flops = 4 * rows_p * d_model * d_ff     # two matmuls
    act_bytes = 2 * rows_p * d_model * itemsize        # x read + out write

    if resident:
        cost = pl.CostEstimate(flops=flops, transcendentals=0,
                               bytes_accessed=int(act_bytes + w_bytes))
        out2d = pl.pallas_call(
            _ffn_kernel_resident,
            out_shape=jax.ShapeDtypeStruct((rows_p, d_model), x.dtype),
            grid_spec=pltpu.PrefetchScalarGridSpec(
                num_scalar_prefetch=0,
                grid=(n_row_tiles,),
                in_specs=[
                    pl.BlockSpec((tm, d_model),   lambda i: (i, 0)),   # x rows
                    pl.BlockSpec((d_model, d_ff), lambda i: (0, 0)),   # W1 (resident)
                    pl.BlockSpec((1, d_ff),       lambda i: (0, 0)),   # b1
                    pl.BlockSpec((d_ff, d_model), lambda i: (0, 0)),   # W2 (resident)
                    pl.BlockSpec((1, d_model),    lambda i: (0, 0)),   # b2
                ],
                out_specs=pl.BlockSpec((tm, d_model), lambda i: (i, 0)),
            ),
            compiler_params=pltpu.CompilerParams(
                dimension_semantics=("parallel",),
                vmem_limit_bytes=vmem_limit,
            ),
            cost_estimate=cost,
        )(x2d, w1, b1_2d, w2, b2_2d)
    else:
        # Weights re-streamed once per row tile -> reflect that in the estimate.
        cost = pl.CostEstimate(
            flops=flops, transcendentals=0,
            bytes_accessed=int(act_bytes + n_row_tiles * w_bytes))
        out2d = pl.pallas_call(
            _ffn_kernel_streamed,
            out_shape=jax.ShapeDtypeStruct((rows_p, d_model), x.dtype),
            grid_spec=pltpu.PrefetchScalarGridSpec(
                num_scalar_prefetch=0,
                grid=(n_row_tiles, d_ff // tf),
                in_specs=[
                    pl.BlockSpec((tm, d_model), lambda i, f: (i, 0)),   # x rows
                    pl.BlockSpec((d_model, tf), lambda i, f: (0, f)),   # W1 slab
                    pl.BlockSpec((1, tf),       lambda i, f: (0, f)),   # b1 slab
                    pl.BlockSpec((tf, d_model), lambda i, f: (f, 0)),   # W2 slab
                    pl.BlockSpec((1, d_model),  lambda i, f: (0, 0)),   # b2
                ],
                out_specs=pl.BlockSpec((tm, d_model), lambda i, f: (i, 0)),
                scratch_shapes=[pltpu.VMEM((tm, d_model), jnp.float32)],
            ),
            compiler_params=pltpu.CompilerParams(
                dimension_semantics=("parallel", "arbitrary"),
                vmem_limit_bytes=vmem_limit,
            ),
            cost_estimate=cost,
        )(x2d, w1, b1_2d, w2, b2_2d)

    if rows_p != rows:
        out2d = out2d[:rows]
    out = out2d.reshape(batch, seq, d_model)
    return out.astype(orig_dtype) if compute_dtype is not None else out


# ----------------------------------------------------------------------------
# Init + reference + tests
# ----------------------------------------------------------------------------
def init_params(key, d_model, d_ff, dtype=jnp.float32):
    """Matches nn.Linear's U(-1/sqrt(fan_in), 1/sqrt(fan_in)) init."""
    k1, k2, k3, k4 = jax.random.split(key, 4)
    bound1 = 1.0 / math.sqrt(d_model)
    bound2 = 1.0 / math.sqrt(d_ff)
    w1 = jax.random.uniform(k1, (d_model, d_ff), jnp.float32, -bound1, bound1)
    b1 = jax.random.uniform(k2, (d_ff,), jnp.float32, -bound1, bound1)
    w2 = jax.random.uniform(k3, (d_ff, d_model), jnp.float32, -bound2, bound2)
    b2 = jax.random.uniform(k4, (d_model,), jnp.float32, -bound2, bound2)
    return (w1.astype(dtype), b1.astype(dtype), w2.astype(dtype), b2.astype(dtype))


def _ref_ffn(x, w1, b1, w2, b2):
    xf = x.astype(jnp.float32)
    h = jnp.maximum(xf @ w1.astype(jnp.float32) + b1.astype(jnp.float32), 0.0)
    return h @ w2.astype(jnp.float32) + b2.astype(jnp.float32)


if __name__ == "__main__":
    key = jax.random.PRNGKey(0)
    kx, kp, kx2, kp2 = jax.random.split(key, 4)

    # --- Test 1: small f32 shapes -> weights-resident single-pass path. ---
    batch, seq, d_model, d_ff = 2, 8, 32, 64
    x = jax.random.normal(kx, (batch, seq, d_model), jnp.float32)
    w1, b1, w2, b2 = init_params(kp, d_model, d_ff)
    out = jax.block_until_ready(feed_forward(x, w1, b1, w2, b2))
    ref = _ref_ffn(x, w1, b1, w2, b2)
    assert out.shape == (batch, seq, d_model)
    assert jnp.allclose(out, ref, atol=1e-4, rtol=1e-4)

    # --- Test 2: forced streaming path (d_ff reduction axis + row padding). ---
    batch2, seq2, d_model2, d_ff2 = 3, 5, 128, 256   # rows=15 -> padded to 16
    x2 = jax.random.normal(kx2, (batch2, seq2, d_model2), jnp.float32)
    w1b, b1b, w2b, b2b = init_params(kp2, d_model2, d_ff2)
    out2 = jax.block_until_ready(
        feed_forward(x2, w1b, b1b, w2b, b2b,
                     row_tile=8, ff_tile=128, weights_resident=False))
    ref2 = _ref_ffn(x2, w1b, b1b, w2b, b2b)
    assert jnp.allclose(out2, ref2, atol=1e-3, rtol=1e-3)

    # --- Test 3: bf16 operands (native MXU path), resident, relaxed tol. ---
    xb = x2.astype(jnp.bfloat16)
    w1c, b1c, w2c, b2c = (a.astype(jnp.bfloat16) for a in (w1b, b1b, w2b, b2b))
    out3 = jax.block_until_ready(feed_forward(xb, w1c, b1c, w2c, b2c))
    ref3 = _ref_ffn(xb, w1c, b1c, w2c, b2c)
    assert jnp.allclose(out3.astype(jnp.float32), ref3, atol=5e-2, rtol=5e-2)

    # --- Test 4: bf16 streamed path (acc scratch + f epilogue). ---
    out4 = jax.block_until_ready(
        feed_forward(xb, w1c, b1c, w2c, b2c,
                     row_tile=8, ff_tile=128, weights_resident=False))
    assert jnp.allclose(out4.astype(jnp.float32), ref3, atol=5e-2, rtol=5e-2)

    print("KERNEL_OK")
</pallas_src>

<mosaic_0001>
module attributes {stable_mosaic.version = 11 : i64} {
  func.func @_ffn_kernel_resident(%arg0: i32, %arg1: memref<16x32xf32, #tpu.memory_space<vmem>>, %arg2: memref<32x64xf32, #tpu.memory_space<vmem>>, %arg3: memref<1x64xf32, #tpu.memory_space<vmem>>, %arg4: memref<64x32xf32, #tpu.memory_space<vmem>>, %arg5: memref<1x32xf32, #tpu.memory_space<vmem>>, %arg6: memref<16x32xf32, #tpu.memory_space<vmem>>) attributes {dimension_semantics = [#tpu.dimension_semantics<parallel>], iteration_bounds = array<i64: 1>, scalar_prefetch = 0 : i64, scratch_operands = 0 : i64, tpu.core_type = #tpu.core_type<tc>, window_params = [{transform_indices = @transform_0, window_bounds = array<i64: 16, 32>}, {pipeline_mode = #tpu.pipeline_mode<synchronous>, transform_indices = @transform_1, window_bounds = array<i64: 32, 64>}, {pipeline_mode = #tpu.pipeline_mode<synchronous>, transform_indices = @transform_2, window_bounds = array<i64: 1, 64>}, {pipeline_mode = #tpu.pipeline_mode<synchronous>, transform_indices = @transform_3, window_bounds = array<i64: 64, 32>}, {pipeline_mode = #tpu.pipeline_mode<synchronous>, transform_indices = @transform_4, window_bounds = array<i64: 1, 32>}, {transform_indices = @transform_5, window_bounds = array<i64: 16, 32>}]} {
    %c0 = arith.constant 0 : index
    %c0_0 = arith.constant 0 : index
    %0 = vector.load %arg1[%c0, %c0_0] : memref<16x32xf32, #tpu.memory_space<vmem>>, vector<16x32xf32>
    %c0_1 = arith.constant 0 : index
    %c0_2 = arith.constant 0 : index
    %1 = vector.load %arg2[%c0_1, %c0_2] : memref<32x64xf32, #tpu.memory_space<vmem>>, vector<32x64xf32>
    %cst = arith.constant dense<0.000000e+00> : vector<16x64xf32>
    %2 = tpu.matmul %0, %1, %cst {dimension_numbers = #tpu.dot_dimension_numbers<[1], [0], [0], [1], [0, 0, 1, 1], [], []>} : vector<16x32xf32>, vector<32x64xf32>, vector<16x64xf32> -> vector<16x64xf32>
    %c0_3 = arith.constant 0 : index
    %c0_4 = arith.constant 0 : index
    %3 = vector.load %arg3[%c0_3, %c0_4] : memref<1x64xf32, #tpu.memory_space<vmem>>, vector<1x64xf32>
    %4 = vector.broadcast %3 : vector<1x64xf32> to vector<16x64xf32>
    %5 = arith.addf %2, %4 : vector<16x64xf32>
    %cst_5 = arith.constant 0.000000e+00 : f32
    %6 = vector.broadcast %cst_5 : f32 to vector<16x64xf32>
    %7 = arith.maximumf %5, %6 : vector<16x64xf32>
    %c0_6 = arith.constant 0 : index
    %c0_7 = arith.constant 0 : index
    %8 = vector.load %arg4[%c0_6, %c0_7] : memref<64x32xf32, #tpu.memory_space<vmem>>, vector<64x32xf32>
    %cst_8 = arith.constant dense<0.000000e+00> : vector<16x32xf32>
    %9 = tpu.matmul %7, %8, %cst_8 {dimension_numbers = #tpu.dot_dimension_numbers<[1], [0], [0], [1], [0, 0, 1, 1], [], []>} : vector<16x64xf32>, vector<64x32xf32>, vector<16x32xf32> -> vector<16x32xf32>
    %c0_9 = arith.constant 0 : index
    %c0_10 = arith.constant 0 : index
    %10 = vector.load %arg5[%c0_9, %c0_10] : memref<1x32xf32, #tpu.memory_space<vmem>>, vector<1x32xf32>
    %11 = vector.broadcast %10 : vector<1x32xf32> to vector<16x32xf32>
    %12 = arith.addf %9, %11 : vector<16x32xf32>
    %c0_11 = arith.constant 0 : index
    %c0_12 = arith.constant 0 : index
    %13 = vector.load %arg6[%c0_11, %c0_12] : memref<16x32xf32, #tpu.memory_space<vmem>>, vector<16x32xf32>
    tpu.vector_store %arg6[%c0_11, %c0_12], %12 {strides = array<i32>} : memref<16x32xf32, #tpu.memory_space<vmem>>, vector<16x32xf32>,
    return
  }
  func.func @transform_0(%arg0: i32) -> (i32, i32) {
    %c0_i32 = arith.constant 0 : i32
    %c0_i32_0 = arith.constant 0 : i32
    return %arg0, %c0_i32 : i32, i32
  }
  func.func @transform_1(%arg0: i32) -> (i32, i32) {
    %c0_i32 = arith.constant 0 : i32
    %c0_i32_0 = arith.constant 0 : i32
    %c0_i32_1 = arith.constant 0 : i32
    return %c0_i32, %c0_i32_0 : i32, i32
  }
  func.func @transform_2(%arg0: i32) -> (i32, i32) {
    %c0_i32 = arith.constant 0 : i32
    %c0_i32_0 = arith.constant 0 : i32
    %c0_i32_1 = arith.constant 0 : i32
    return %c0_i32, %c0_i32_0 : i32, i32
  }
  func.func @transform_3(%arg0: i32) -> (i32, i32) {
    %c0_i32 = arith.constant 0 : i32
    %c0_i32_0 = arith.constant 0 : i32
    %c0_i32_1 = arith.constant 0 : i32
    return %c0_i32, %c0_i32_0 : i32, i32
  }
  func.func @transform_4(%arg0: i32) -> (i32, i32) {
    %c0_i32 = arith.constant 0 : i32
    %c0_i32_0 = arith.constant 0 : i32
    %c0_i32_1 = arith.constant 0 : i32
    return %c0_i32, %c0_i32_0 : i32, i32
  }
  func.func @transform_5(%arg0: i32) -> (i32, i32) {
    %c0_i32 = arith.constant 0 : i32
    %c0_i32_0 = arith.constant 0 : i32
    return %arg0, %c0_i32 : i32, i32
  }
}

</mosaic_0001>

<llo_original>
// kernel: tpu_custom_call.1
$region0: #{tpu_custom_call.1}
  #allocation0 [shape = 'u32[]', space=smem, size = 0x4, offset = 0x4, fixed_abs, tag = 'smem constant byte address 0x4 - core index']
  #allocation1 [shape = 'u32[72,128]{1,0:T(1,128)}', space=vmem, size = 0x9000, scoped, tag = 'internal scratch']
  %s0 = inlined_call_operand.vmem [shape: f32[16,32], index: 0, kind: input, shape index: {}]
  %s1 = inlined_call_operand.vmem [shape: f32[32,64], index: 1, kind: input, shape index: {}]
  %s2 = inlined_call_operand.vmem [shape: f32[1,64], index: 2, kind: input, shape index: {}]
  %s3 = inlined_call_operand.vmem [shape: f32[64,32], index: 3, kind: input, shape index: {}]
  %s4 = inlined_call_operand.vmem [shape: f32[1,32], index: 4, kind: input, shape index: {}]
  %s5 = inlined_call_operand.hbm [shape: f32[16,32], index: 5, kind: output, shape index: {}]
  %s6 = sld [smem:[#allocation0]]
  $region30: #{tpu_custom_call.1} parent=0
    _
  %s8 = ssub.s32 1, %s6
  %s9 = scalar_select 0, %s8, %s6
  $region1: #{tpu_custom_call.1} parent=0
    #allocation2 [shape = 'u8[8192]{0}', space=vmem, size = 0x2000, scoped, tag = 'output window, operand 0, single buffered']
    #allocation3 [shape = 's32[1]{0}', space=sflag, size = 0x4, scoped, tag = 'scoped memory for tpu_custom_call.1']
    %10 = vsyncpa [#allocation3], 0
    // Predicated region
    $region2: #{tpu_custom_call.1} parent=1 // pred_check
      _
    $region3: #{tpu_custom_call.1} parent=1 // pred_check_branch
      %12 = sbr.rel (0) target = $region5
    $region4: #{tpu_custom_call.1} parent=1 // pred_region
      _
    $region5: #{tpu_custom_call.1} parent=1 // pred_fallthru
      _
    // Predicated region
    $region6: #{tpu_custom_call.1} parent=1 // pred_check
      _
    $region7: #{tpu_custom_call.1} parent=1 // pred_check_branch
      %14 = sbr.rel (0) target = $region9
    $region8: #{tpu_custom_call.1} parent=1 // pred_region
      _
    $region9: #{tpu_custom_call.1} parent=1 // pred_fallthru
      _
    // Predicated region
    $region10: #{tpu_custom_call.1} parent=1 // pred_check
      _
    $region11: #{tpu_custom_call.1} parent=1 // pred_check_branch
      %16 = sbr.rel (0) target = $region13
    $region12: #{tpu_custom_call.1} parent=1 // pred_region
      _
    $region13: #{tpu_custom_call.1} parent=1 // pred_fallthru
      _
    // Predicated region
    $region14: #{tpu_custom_call.1} parent=1 // pred_check
      _
    $region15: #{tpu_custom_call.1} parent=1 // pred_check_branch
      %18 = sbr.rel (0) target = $region17
    $region16: #{tpu_custom_call.1} parent=1 // pred_region
      _
    $region17: #{tpu_custom_call.1} parent=1 // pred_fallthru
      _
    // Predicated region
    $region18: #{tpu_custom_call.1} parent=1 // pred_check
      _
    $region19: #{tpu_custom_call.1} parent=1 // pred_check_branch
      %20 = sbr.rel (0) target = $region21
    $region20: #{tpu_custom_call.1} parent=1 // pred_region
      _
    $region21: #{tpu_custom_call.1} parent=1 // pred_fallthru
      _
    %v21 = vld [vmem:[%s0] sm:$0xff]
    %v22 = vld [vmem:[%s0 + $0x8] sm:$0xff]
    %v23 = vld [vmem:[%s1] sm:$0xff]
    %v24 = vld [vmem:[%s1 + $0x8] sm:$0xff]
    %v25 = vld [vmem:[%s1 + $0x10] sm:$0xff]
    %v26 = vld [vmem:[%s1 + $0x18] sm:$0xff]
    %v27 = vld [vmem:[%s2] sm:$0x1]
    %v29 = vperm.slane %v27, 0
    %vm31 = vcmask 261120
    %v33 = vsel %vm31, %v21, 0
    %v36 = vsel %vm31, %v22, 0
    %38 = vmatpush.msra.mxu0 0.0
    %39 = vmatpush.msra.mxu0 0.0
    %40 = vmatpush.msra.mxu0 0.0
    %41 = vmatpush.msra.mxu0 0.0
    %42 = vmatpush.msra.mxu0 0.0
    %43 = vmatpush.msra.mxu0 0.0
    %44 = vmatpush.msra.mxu0 0.0
    %45 = vmatpush.msra.mxu0 0.0
    %46 = vmatpush.msra.mxu0 0.0
    %47 = vmatpush.msra.mxu0 0.0
    %48 = vmatpush.msra.mxu0 0.0
    %49 = vmatpush.msra.mxu0 0.0
    %50 = vmatpush.msra.mxu0 %v26
    %51 = vmatpush.msra.mxu0 %v25
    %52 = vmatpush.msra.mxu0 %v24
    %53 = vmatpush.msra.mxu0 %v23
    %54 = vmatmul.f32.gmra.mxu0 %v33
    %v55 = vpop.f32.mrf.mxu0
    %v56 = vadd.f32 %v29, %v55
    %57 = vmatmul.f32.gmra.mxu0 %v36
    %v58 = vpop.f32.mrf.mxu0
    %v59 = vadd.f32 %v29, %v58
    %60 = vdwg.mxu0
    %v61 = vmax.f32 %v56, 0.0
    %v62 = vmax.f32 %v59, 0.0
    %v63 = vld [vmem:[%s3] sm:$0xff]
    %v64 = vld [vmem:[%s3 + $0x8] sm:$0xff]
    %v65 = vld [vmem:[%s3 + $0x10] sm:$0xff]
    %v66 = vld [vmem:[%s3 + $0x18] sm:$0xff]
    %v67 = vld [vmem:[%s3 + $0x20] sm:$0xff]
    %v68 = vld [vmem:[%s3 + $0x28] sm:$0xff]
    %v69 = vld [vmem:[%s3 + $0x30] sm:$0xff]
    %v70 = vld [vmem:[%s3 + $0x38] sm:$0xff]
    %v71 = vld [vmem:[%s4] sm:$0x1]
    %v73 = vperm.slane %v71, 0
    %vm75 = vcmask 523264
    %v77 = vsel %vm75, %v61, 0
    %v80 = vsel %vm75, %v62, 0
    %82 = vmatpush.msra.mxu0 0.0
    %83 = vmatpush.msra.mxu0 0.0
    %84 = vmatpush.msra.mxu0 0.0
    %85 = vmatpush.msra.mxu0 0.0
    %86 = vmatpush.msra.mxu0 0.0
    %87 = vmatpush.msra.mxu0 0.0
    %88 = vmatpush.msra.mxu0 0.0
    %89 = vmatpush.msra.mxu0 0.0
    %90 = vmatpush.msra.mxu0 %v70
    %91 = vmatpush.msra.mxu0 %v69
    %92 = vmatpush.msra.mxu0 %v68
    %93 = vmatpush.msra.mxu0 %v67
    %94 = vmatpush.msra.mxu0 %v66
    %95 = vmatpush.msra.mxu0 %v65
    %96 = vmatpush.msra.mxu0 %v64
    %97 = vmatpush.msra.mxu0 %v63
    %98 = vmatmul.f32.gmra.mxu0 %v77
    %v99 = vpop.f32.mrf.mxu0
    %v100 = vadd.f32 %v73, %v99
    %101 = vmatmul.f32.gmra.mxu0 %v80
    %v102 = vpop.f32.mrf.mxu0
    %v103 = vadd.f32 %v73, %v102
    %104 = vdwg.mxu0
    %105 = vst.msk [vmem:[#allocation2] sm:$0xff] %vm31, %v100
    %106 = vst.msk [vmem:[#allocation2 + $0x8] sm:$0xff] %vm31, %v103
    // Predicated region
    $region22: #{tpu_custom_call.1} parent=1 // pred_check
      _
    $region23: #{tpu_custom_call.1} parent=1 // pred_check_branch
      %108 = sbr.rel (0) target = $region25
    $region24: #{tpu_custom_call.1} parent=1 // pred_region
      %110 = vsyncadd [#allocation3], 0
      %s111 = sshll.u32 [#allocation2], 4
      %s112 = int_to_ptr.vmem [resolvable:$true] %s111
      %s113 = sshll.u32 %s5, 4
      %s114 = int_to_ptr.hbm [resolvable:$true] %s113
      %119 = dma.vmem_to_hbm [thread:$0]  %s112, 256, %s114, [#allocation3], 128, 128, 8
    $region25: #{tpu_custom_call.1} parent=1 // pred_fallthru
      _
    // Predicated region
    $region26: #{tpu_custom_call.1} parent=1 // pred_check
      _
    $region27: #{tpu_custom_call.1} parent=1 // pred_check_branch
      %121 = sbr.rel (0) target = $region29
    $region28: #{tpu_custom_call.1} parent=1 // pred_region
      %123 = dma.done [#allocation3], 256
    $region29: #{tpu_custom_call.1} parent=1 // pred_fallthru
      _
    %124 = vsyncpa [#allocation3], 1

</llo_original>
